<compile_context>
chip_gen: v7x
topology: tpu7x:2x2x1
jax: 0.10.0
libtpu: 0.0.40
codegen_flags: <defaults>
</compile_context>

<pallas_src>
import functools
import math

import jax
import jax.numpy as jnp
from jax import lax
from jax.experimental import pallas as pl
from jax.experimental.pallas import tpu as pltpu

_LANE = 128


def _hw_defaults():
    """(tensorcores per device, VMEM budget for input pipeline buffers, vmem cap)."""
    try:
        kind = jax.devices()[0].device_kind.lower()
    except Exception:  # pragma: no cover
        kind = ""
    two_tc = ("v7" in kind) or ("v4" in kind) or ("v5p" in kind)
    if "v7" in kind:                      # 64 MiB physical VMEM per TensorCore
        return 2, 20 << 20, 48 << 20
    return (2 if two_tc else 1), 40 << 20, 100 << 20


def _cmd_powersum_kernel(piv_ref, x1_ref, x2_ref, o_ref, *, n_moments, sub, unroll):
    """Raw power sums of pivot-shifted data for one (tile_rows, 128) tile pair.

    piv_ref : (2, B) f32 in SMEM      -- per-row pivots (prefix means).
    x*_ref  : (tile_rows, 128), native dtype, lane/sublane dense.
    o_ref   : (2*n_moments, sub, 128) f32, resident across the reduction axis;
              rows [0, M) hold x1 partials, rows [M, 2M) hold x2 partials.
    """
    b = pl.program_id(1)
    t = pl.program_id(2)

    @pl.when(t == 0)
    def _init():
        o_ref[...] = jnp.zeros_like(o_ref)

    tile_rows = x1_ref.shape[0]
    n_chunks = tile_rows // sub

    # Loop-invariant pivot broadcasts, hoisted out of the hot loop.
    pv1 = jnp.full((sub, _LANE), piv_ref[0, b], jnp.float32)
    pv2 = jnp.full((sub, _LANE), piv_ref[1, b], jnp.float32)

    def body(c, accs):
        acc1, acc2 = accs
        r = pl.multiple_of(c * sub, sub)
        v1 = x1_ref[pl.ds(r, sub), :].astype(jnp.float32) - pv1
        v2 = x2_ref[pl.ds(r, sub), :].astype(jnp.float32) - pv2
        p1, p2 = v1, v2
        n1, n2 = [], []
        for k in range(n_moments):
            n1.append(acc1[k] + p1)
            n2.append(acc2[k] + p2)
            if k + 1 < n_moments:            # carried running power: no integer_pow
                p1 = p1 * v1
                p2 = p2 * v2
        return tuple(n1), tuple(n2)

    zeros = tuple(jnp.zeros((sub, _LANE), jnp.float32) for _ in range(n_moments))
    acc1, acc2 = lax.fori_loop(0, n_chunks, body, (zeros, zeros), unroll=unroll)

    # Full-vreg, unmasked (sub, 128) read-modify-writes of the resident block.
    for k in range(n_moments):
        o_ref[k] = o_ref[k] + acc1[k]
        o_ref[n_moments + k] = o_ref[n_moments + k] + acc2[k]


def _powsums_jax(x, piv, n_moments):
    """Power sums of (x - piv) over non-batch elements; returns (n_moments, B) f32."""
    b = x.shape[0]
    if x.size == 0:
        return jnp.zeros((n_moments, b), jnp.float32)
    y = x.astype(jnp.float32).reshape(b, -1) - piv[:, None]
    p = y
    out = []
    for k in range(n_moments):
        out.append(jnp.sum(p, axis=1))
        if k + 1 < n_moments:
            p = p * y
    return jnp.stack(out)


def _cmd_loss_jax(x1, x2, n_moments):
    """Two-pass plain-JAX CMD mirroring the PyTorch module (fallback + test ref)."""
    b = x1.shape[0]
    x1 = x1.reshape(b, -1).astype(jnp.float32)
    x2 = x2.reshape(b, -1).astype(jnp.float32)
    mx1 = jnp.mean(x1, axis=1, keepdims=True)
    mx2 = jnp.mean(x2, axis=1, keepdims=True)
    sx1 = x1 - mx1
    sx2 = x2 - mx2
    scms = jnp.sqrt(jnp.abs(jnp.sum((mx1 - mx2) ** 2) + 1e-6))
    for i in range(n_moments - 1):
        k = i + 2
        ss1 = jnp.mean(sx1 ** k, axis=1, keepdims=True)
        ss2 = jnp.mean(sx2 ** k, axis=1, keepdims=True)
        scms = scms + jnp.sqrt(jnp.abs(jnp.sum((ss1 - ss2) ** 2) + 1e-6))
    return scms / b


_reference = _cmd_loss_jax


def _finalize(sums, rem1, rem2, piv1, piv2, n_moments, d_true, batch):
    """Pivot-shifted raw power sums -> central moments -> CMD (matches torch)."""
    s1 = sums[:, :n_moments].T + rem1            # (n_moments, B)
    s2 = sums[:, n_moments:].T + rem2
    r1 = s1 / d_true                             # r1[k-1] = E[(x1 - piv1)^k] per row
    r2 = s2 / d_true
    mu1 = piv1 + r1[0]                           # true per-row means
    mu2 = piv2 + r2[0]

    def matchnorm(a, b):
        return jnp.sqrt(jnp.abs(jnp.sum((a - b) ** 2) + 1e-6))

    def central(r, k):
        # Central moments are shift invariant: binomial expansion around the pivot.
        my = r[0]
        m = jnp.zeros_like(my)
        for j in range(k + 1):
            rj = jnp.ones_like(my) if j == 0 else r[j - 1]
            m = m + math.comb(k, j) * rj * (-my) ** (k - j)
        return m

    scms = matchnorm(mu1, mu2)
    for k in range(2, n_moments + 1):
        scms = scms + matchnorm(central(r1, k), central(r2, k))
    return scms / batch


@functools.partial(jax.jit, static_argnames=("n_moments", "tile_rows", "num_splits"))
def cmd_agnostic_loss(x1, x2, n_moments, tile_rows=None, num_splits=None):
    """JAX/Pallas equivalent of CMD_Agnostic_loss.forward(x1, x2, n_moments)."""
    batch = x1.shape[0]
    x1f = x1.reshape(batch, -1)
    x2f = x2.reshape(batch, -1)
    if x2f.shape != x1f.shape:
        # TODO(synk): unequal x1/x2 feature dims -> plain-JAX path.
        return _cmd_loss_jax(x1f, x2f, n_moments)

    d = x1f.shape[1]
    itemsize = jnp.dtype(x1f.dtype).itemsize

    # Per-row pivots (prefix means), quantized to the input dtype so that
    # pivot-valued lane padding contributes exactly zero to every power sum.
    prefix = min(d, 4096)
    piv1 = jnp.mean(x1f[:, :prefix].astype(jnp.float32), axis=1)
    piv2 = jnp.mean(x2f[:, :prefix].astype(jnp.float32), axis=1)
    piv1 = piv1.astype(x1f.dtype).astype(jnp.float32)
    piv2 = piv2.astype(x2f.dtype).astype(jnp.float32)

    # Lane alignment: pad D up to a multiple of 128 with the pivot value (exact).
    lane_rem = d % _LANE
    if lane_rem:
        # TODO(synk): mask the ragged lane tail in-kernel to avoid this copy.
        pad = _LANE - lane_rem
        x1f = jnp.concatenate(
            [x1f, jnp.broadcast_to(piv1[:, None].astype(x1f.dtype), (batch, pad))], axis=1)
        x2f = jnp.concatenate(
            [x2f, jnp.broadcast_to(piv2[:, None].astype(x2f.dtype), (batch, pad))], axis=1)
    r_total = x1f.shape[1] // _LANE

    # Sublane chunk: full packed vregs (8 rows f32 / 16 rows bf16).
    sub = 16 if (itemsize == 2 and r_total >= 16) else 8
    if r_total < sub:
        return _cmd_loss_jax(x1.reshape(batch, -1), x2.reshape(batch, -1), n_moments)

    n_cores, vmem_budget, vmem_cap = _hw_defaults()

    # Tile rows: ~2 MiB per input block (>= ~1 MiB keeps the ~0.35 us per-step
    # pipeline overhead negligible), capped by the generation-aware VMEM budget
    # for the 2 inputs x 2 pipeline buffers and by the available rows.
    if tile_rows is None:
        tile_rows = (2 << 20) // (_LANE * itemsize)
        tile_rows = min(tile_rows, vmem_budget // (4 * _LANE * itemsize))
    tile_rows = min(tile_rows, (r_total // sub) * sub)
    tile_rows = max(sub, (tile_rows // sub) * sub)

    n_tiles_total = r_total // tile_rows
    if num_splits is None:
        num_splits = n_cores          # 2 only on multi-TensorCore chips (v7x/v4/v5p)
    num_splits = max(1, min(num_splits, n_tiles_total))
    tiles_per_split = n_tiles_total // num_splits
    kernel_rows = num_splits * tiles_per_split * tile_rows

    x1r = x1f.reshape(batch, r_total, _LANE)       # free reshape (row-major)
    x2r = x2f.reshape(batch, r_total, _LANE)

    # Ragged row tail: tiny plain-JAX power sums instead of padding the inputs.
    if r_total - kernel_rows:
        rem1 = _powsums_jax(x1r[:, kernel_rows:, :], piv1, n_moments)
        rem2 = _powsums_jax(x2r[:, kernel_rows:, :], piv2, n_moments)
    else:
        rem1 = jnp.zeros((n_moments, batch), jnp.float32)
        rem2 = jnp.zeros((n_moments, batch), jnp.float32)

    pivots = jnp.stack([piv1, piv2])               # (2, B) f32 -> SMEM

    n_chunks = tile_rows // sub
    unroll = next(u for u in (8, 4, 2, 1) if n_chunks % u == 0)

    out_shape = jax.ShapeDtypeStruct(
        (num_splits * batch, 2 * n_moments, sub, _LANE), jnp.float32)
    out_bytes = num_splits * batch * 2 * n_moments * sub * _LANE * 4

    piv_spec = pl.BlockSpec(memory_space=pltpu.MemorySpace.SMEM)
    x_index = lambda s, b, t: (b, s * tiles_per_split + t, 0)
    x_spec = pl.BlockSpec((None, tile_rows, _LANE), x_index)
    out_spec = pl.BlockSpec((None, 2 * n_moments, sub, _LANE),
                            lambda s, b, t: (s * batch + b, 0, 0, 0))

    in_block = tile_rows * _LANE * itemsize
    out_block = 2 * n_moments * sub * _LANE * 4
    vmem_limit = int(min(max(4 * in_block + 2 * out_block + (4 << 20), 16 << 20),
                         vmem_cap))

    cost = pl.CostEstimate(
        flops=2 * batch * d * 2 * n_moments,
        transcendentals=0,
        bytes_accessed=2 * batch * d * itemsize + out_bytes)

    partials = pl.pallas_call(
        functools.partial(_cmd_powersum_kernel,
                          n_moments=n_moments, sub=sub, unroll=unroll),
        out_shape=out_shape,
        grid_spec=pltpu.PrefetchScalarGridSpec(
            num_scalar_prefetch=0,
            grid=(num_splits, batch, tiles_per_split),
            in_specs=[piv_spec, x_spec, x_spec],
            out_specs=out_spec),
        compiler_params=pltpu.CompilerParams(
            dimension_semantics=("parallel", "parallel", "arbitrary"),
            vmem_limit_bytes=vmem_limit),
        cost_estimate=cost,
    )(pivots, x1r, x2r)

    # Deferred sublane + lane reduce and split combine (tiny epilogue).
    sums = jnp.sum(partials, axis=(2, 3))                        # (S*B, 2M)
    sums = jnp.sum(sums.reshape(num_splits, batch, -1), axis=0)  # (B, 2M)
    return _finalize(sums, rem1, rem2, piv1, piv2, n_moments, d, batch)


if __name__ == "__main__":
    key = jax.random.PRNGKey(0)
    k1, k2, k3, k4, k5, k6, k7, k8 = jax.random.split(key, 8)
    n_moments = 4

    # 1) Module-sized input (B=2, C=4, H=16, W=16 -> D=1024), default tiling.
    x1 = jax.random.normal(k1, (2, 4, 16, 16), dtype=jnp.float32)
    x2 = jax.random.normal(k2, (2, 4, 16, 16), dtype=jnp.float32) * 0.9 + 0.1
    ref = _reference(x1, x2, n_moments)
    out = cmd_agnostic_loss(x1, x2, n_moments)
    jax.block_until_ready(out)
    assert jnp.allclose(out, ref, rtol=1e-4, atol=1e-6), (out, ref)

    # 2) Larger D, forced small tiles + 2-way split: exercises the multi-step
    #    "arbitrary" reduction axis and the leading parallel split axis.
    x1b = jax.random.normal(k3, (2, 8, 16, 32), dtype=jnp.float32) + 0.5
    x2b = jax.random.normal(k4, (2, 8, 16, 32), dtype=jnp.float32) * 1.1 - 0.3
    ref2 = _reference(x1b, x2b, n_moments)
    out2 = cmd_agnostic_loss(x1b, x2b, n_moments, tile_rows=8, num_splits=2)
    jax.block_until_ready(out2)
    assert jnp.allclose(out2, ref2, rtol=1e-4, atol=1e-6), (out2, ref2)

    # 3) Ragged D (not a multiple of 128): pivot-valued lane pad + plain-JAX
    #    row-tail path.
    x1c = jax.random.normal(k5, (2, 3, 17, 29), dtype=jnp.float32) - 0.2
    x2c = jax.random.normal(k6, (2, 3, 17, 29), dtype=jnp.float32) * 0.8 + 0.4
    ref3 = _reference(x1c, x2c, n_moments)
    out3 = cmd_agnostic_loss(x1c, x2c, n_moments)
    jax.block_until_ready(out3)
    assert jnp.allclose(out3, ref3, rtol=1e-4, atol=1e-6), (out3, ref3)

    # 4) bf16 activations: packed (16, 128) loads, f32 accumulation in-kernel.
    x1d = (jax.random.normal(k7, (2, 4, 16, 32), dtype=jnp.float32) + 0.3).astype(jnp.bfloat16)
    x2d = (jax.random.normal(k8, (2, 4, 16, 32), dtype=jnp.float32) * 1.2).astype(jnp.bfloat16)
    ref4 = _reference(x1d, x2d, n_moments)
    out4 = cmd_agnostic_loss(x1d, x2d, n_moments)
    jax.block_until_ready(out4)
    assert jnp.allclose(out4, ref4, rtol=2e-3, atol=1e-4), (out4, ref4)

    print("KERNEL_OK")
</pallas_src>

<mosaic_0001>
module attributes {stable_mosaic.version = 11 : i64} {
  func.func @_cmd_powersum_kernel(%arg0: i32, %arg1: i32, %arg2: i32, %arg3: memref<2x2xf32, #tpu.memory_space<smem>>, %arg4: memref<1x8x128xf32, #tpu.memory_space<vmem>>, %arg5: memref<1x8x128xf32, #tpu.memory_space<vmem>>, %arg6: memref<1x8x8x128xf32, #tpu.memory_space<vmem>>) attributes {dimension_semantics = [#tpu.dimension_semantics<parallel>, #tpu.dimension_semantics<parallel>, #tpu.dimension_semantics<arbitrary>], iteration_bounds = array<i64: 1, 2, 1>, scalar_prefetch = 0 : i64, scratch_operands = 0 : i64, tpu.core_type = #tpu.core_type<tc>, window_params = [{transform_indices = @transform_0, window_bounds = array<i64: 2, 2>}, {transform_indices = @transform_1, window_bounds = array<i64: 1, 8, 128>}, {transform_indices = @transform_2, window_bounds = array<i64: 1, 8, 128>}, {transform_indices = @transform_3, window_bounds = array<i64: 1, 8, 8, 128>}]} {
    %c0_i32 = arith.constant 0 : i32
    %0 = arith.cmpi eq, %arg2, %c0_i32 : i32
    %1 = arith.extui %0 : i1 to i32
    %c0_i32_0 = arith.constant 0 : i32
    %2 = arith.cmpi ne, %1, %c0_i32_0 : i32
    scf.if %2 {
      %cst_67 = arith.constant 0.000000e+00 : f32
      %85 = vector.broadcast %cst_67 : f32 to vector<8x8x128xf32>
      %c0_68 = arith.constant 0 : index
      %c0_69 = arith.constant 0 : index
      %c0_70 = arith.constant 0 : index
      %c0_71 = arith.constant 0 : index
      %86 = vector.load %arg6[%c0_68, %c0_69, %c0_70, %c0_71] : memref<1x8x8x128xf32, #tpu.memory_space<vmem>>, vector<1x8x8x128xf32>
      %87 = vector.shape_cast %86 : vector<1x8x8x128xf32> to vector<8x8x128xf32>
      %88 = vector.shape_cast %85 : vector<8x8x128xf32> to vector<1x8x8x128xf32>
      tpu.vector_store %arg6[%c0_68, %c0_69, %c0_70, %c0_71], %88 {strides = array<i32>} : memref<1x8x8x128xf32, #tpu.memory_space<vmem>>, vector<1x8x8x128xf32>,
    } else {
    }
    %c0 = arith.constant 0 : index
    %3 = arith.index_cast %arg1 : i32 to index
    %4 = memref.load %arg3[%c0, %3] : memref<2x2xf32, #tpu.memory_space<smem>>
    %5 = vector.broadcast %4 : f32 to vector<8x128xf32>
    %c1 = arith.constant 1 : index
    %6 = arith.index_cast %arg1 : i32 to index
    %7 = memref.load %arg3[%c1, %6] : memref<2x2xf32, #tpu.memory_space<smem>>
    %8 = vector.broadcast %7 : f32 to vector<8x128xf32>
    %cst = arith.constant 0.000000e+00 : f32
    %9 = vector.broadcast %cst : f32 to vector<8x128xf32>
    %cst_1 = arith.constant 0.000000e+00 : f32
    %10 = vector.broadcast %cst_1 : f32 to vector<8x128xf32>
    %cst_2 = arith.constant 0.000000e+00 : f32
    %11 = vector.broadcast %cst_2 : f32 to vector<8x128xf32>
    %cst_3 = arith.constant 0.000000e+00 : f32
    %12 = vector.broadcast %cst_3 : f32 to vector<8x128xf32>
    %c0_i32_4 = arith.constant 0 : i32
    %c8_i32 = arith.constant 8 : i32
    %13 = arith.muli %c0_i32_4, %c8_i32 : i32
    %14 = tpu.assume_multiple %13, 8 : i32
    %c0_5 = arith.constant 0 : index
    %15 = arith.index_cast %14 : i32 to index
    %c0_6 = arith.constant 0 : index
    %16 = vector.load %arg4[%c0_5, %15, %c0_6] : memref<1x8x128xf32, #tpu.memory_space<vmem>>, vector<1x8x128xf32>
    %17 = vector.shape_cast %16 : vector<1x8x128xf32> to vector<8x128xf32>
    %18 = arith.subf %17, %5 : vector<8x128xf32>
    %c0_7 = arith.constant 0 : index
    %19 = arith.index_cast %14 : i32 to index
    %c0_8 = arith.constant 0 : index
    %20 = vector.load %arg5[%c0_7, %19, %c0_8] : memref<1x8x128xf32, #tpu.memory_space<vmem>>, vector<1x8x128xf32>
    %21 = vector.shape_cast %20 : vector<1x8x128xf32> to vector<8x128xf32>
    %22 = arith.subf %21, %8 : vector<8x128xf32>
    %23 = arith.addf %9, %18 : vector<8x128xf32>
    %24 = arith.addf %9, %22 : vector<8x128xf32>
    %25 = arith.mulf %18, %18 : vector<8x128xf32>
    %26 = arith.mulf %22, %22 : vector<8x128xf32>
    %27 = arith.addf %10, %25 : vector<8x128xf32>
    %28 = arith.addf %10, %26 : vector<8x128xf32>
    %29 = arith.mulf %25, %18 : vector<8x128xf32>
    %30 = arith.mulf %26, %22 : vector<8x128xf32>
    %31 = arith.addf %11, %29 : vector<8x128xf32>
    %32 = arith.addf %11, %30 : vector<8x128xf32>
    %33 = arith.mulf %29, %18 : vector<8x128xf32>
    %34 = arith.mulf %30, %22 : vector<8x128xf32>
    %35 = arith.addf %12, %33 : vector<8x128xf32>
    %36 = arith.addf %12, %34 : vector<8x128xf32>
    %c1_i32 = arith.constant 1 : i32
    %c0_9 = arith.constant 0 : index
    %c0_10 = arith.constant 0 : index
    %c0_11 = arith.constant 0 : index
    %c0_12 = arith.constant 0 : index
    %37 = vector.load %arg6[%c0_9, %c0_10, %c0_11, %c0_12] : memref<1x8x8x128xf32, #tpu.memory_space<vmem>>, vector<1x1x8x128xf32>
    %38 = vector.shape_cast %37 : vector<1x1x8x128xf32> to vector<8x128xf32>
    %39 = arith.addf %38, %23 : vector<8x128xf32>
    %c0_13 = arith.constant 0 : index
    %c0_14 = arith.constant 0 : index
    %c0_15 = arith.constant 0 : index
    %c0_16 = arith.constant 0 : index
    %40 = vector.load %arg6[%c0_13, %c0_14, %c0_15, %c0_16] : memref<1x8x8x128xf32, #tpu.memory_space<vmem>>, vector<1x1x8x128xf32>
    %41 = vector.shape_cast %40 : vector<1x1x8x128xf32> to vector<8x128xf32>
    %42 = vector.shape_cast %39 : vector<8x128xf32> to vector<1x1x8x128xf32>
    tpu.vector_store %arg6[%c0_13, %c0_14, %c0_15, %c0_16], %42 {strides = array<i32>} : memref<1x8x8x128xf32, #tpu.memory_space<vmem>>, vector<1x1x8x128xf32>,
    %c0_17 = arith.constant 0 : index
    %c4 = arith.constant 4 : index
    %c0_18 = arith.constant 0 : index
    %c0_19 = arith.constant 0 : index
    %43 = vector.load %arg6[%c0_17, %c4, %c0_18, %c0_19] : memref<1x8x8x128xf32, #tpu.memory_space<vmem>>, vector<1x1x8x128xf32>
    %44 = vector.shape_cast %43 : vector<1x1x8x128xf32> to vector<8x128xf32>
    %45 = arith.addf %44, %24 : vector<8x128xf32>
    %c0_20 = arith.constant 0 : index
    %c4_21 = arith.constant 4 : index
    %c0_22 = arith.constant 0 : index
    %c0_23 = arith.constant 0 : index
    %46 = vector.load %arg6[%c0_20, %c4_21, %c0_22, %c0_23] : memref<1x8x8x128xf32, #tpu.memory_space<vmem>>, vector<1x1x8x128xf32>
    %47 = vector.shape_cast %46 : vector<1x1x8x128xf32> to vector<8x128xf32>
    %48 = vector.shape_cast %45 : vector<8x128xf32> to vector<1x1x8x128xf32>
    tpu.vector_store %arg6[%c0_20, %c4_21, %c0_22, %c0_23], %48 {strides = array<i32>} : memref<1x8x8x128xf32, #tpu.memory_space<vmem>>, vector<1x1x8x128xf32>,
    %c0_24 = arith.constant 0 : index
    %c1_25 = arith.constant 1 : index
    %c0_26 = arith.constant 0 : index
    %c0_27 = arith.constant 0 : index
    %49 = vector.load %arg6[%c0_24, %c1_25, %c0_26, %c0_27] : memref<1x8x8x128xf32, #tpu.memory_space<vmem>>, vector<1x1x8x128xf32>
    %50 = vector.shape_cast %49 : vector<1x1x8x128xf32> to vector<8x128xf32>
    %51 = arith.addf %50, %27 : vector<8x128xf32>
    %c0_28 = arith.constant 0 : index
    %c1_29 = arith.constant 1 : index
    %c0_30 = arith.constant 0 : index
    %c0_31 = arith.constant 0 : index
    %52 = vector.load %arg6[%c0_28, %c1_29, %c0_30, %c0_31] : memref<1x8x8x128xf32, #tpu.memory_space<vmem>>, vector<1x1x8x128xf32>
    %53 = vector.shape_cast %52 : vector<1x1x8x128xf32> to vector<8x128xf32>
    %54 = vector.shape_cast %51 : vector<8x128xf32> to vector<1x1x8x128xf32>
    tpu.vector_store %arg6[%c0_28, %c1_29, %c0_30, %c0_31], %54 {strides = array<i32>} : memref<1x8x8x128xf32, #tpu.memory_space<vmem>>, vector<1x1x8x128xf32>,
    %c0_32 = arith.constant 0 : index
    %c5 = arith.constant 5 : index
    %c0_33 = arith.constant 0 : index
    %c0_34 = arith.constant 0 : index
    %55 = vector.load %arg6[%c0_32, %c5, %c0_33, %c0_34] : memref<1x8x8x128xf32, #tpu.memory_space<vmem>>, vector<1x1x8x128xf32>
    %56 = vector.shape_cast %55 : vector<1x1x8x128xf32> to vector<8x128xf32>
    %57 = arith.addf %56, %28 : vector<8x128xf32>
    %c0_35 = arith.constant 0 : index
    %c5_36 = arith.constant 5 : index
    %c0_37 = arith.constant 0 : index
    %c0_38 = arith.constant 0 : index
    %58 = vector.load %arg6[%c0_35, %c5_36, %c0_37, %c0_38] : memref<1x8x8x128xf32, #tpu.memory_space<vmem>>, vector<1x1x8x128xf32>
    %59 = vector.shape_cast %58 : vector<1x1x8x128xf32> to vector<8x128xf32>
    %60 = vector.shape_cast %57 : vector<8x128xf32> to vector<1x1x8x128xf32>
    tpu.vector_store %arg6[%c0_35, %c5_36, %c0_37, %c0_38], %60 {strides = array<i32>} : memref<1x8x8x128xf32, #tpu.memory_space<vmem>>, vector<1x1x8x128xf32>,
    %c0_39 = arith.constant 0 : index
    %c2 = arith.constant 2 : index
    %c0_40 = arith.constant 0 : index
    %c0_41 = arith.constant 0 : index
    %61 = vector.load %arg6[%c0_39, %c2, %c0_40, %c0_41] : memref<1x8x8x128xf32, #tpu.memory_space<vmem>>, vector<1x1x8x128xf32>
    %62 = vector.shape_cast %61 : vector<1x1x8x128xf32> to vector<8x128xf32>
    %63 = arith.addf %62, %31 : vector<8x128xf32>
    %c0_42 = arith.constant 0 : index
    %c2_43 = arith.constant 2 : index
    %c0_44 = arith.constant 0 : index
    %c0_45 = arith.constant 0 : index
    %64 = vector.load %arg6[%c0_42, %c2_43, %c0_44, %c0_45] : memref<1x8x8x128xf32, #tpu.memory_space<vmem>>, vector<1x1x8x128xf32>
    %65 = vector.shape_cast %64 : vector<1x1x8x128xf32> to vector<8x128xf32>
    %66 = vector.shape_cast %63 : vector<8x128xf32> to vector<1x1x8x128xf32>
    tpu.vector_store %arg6[%c0_42, %c2_43, %c0_44, %c0_45], %66 {strides = array<i32>} : memref<1x8x8x128xf32, #tpu.memory_space<vmem>>, vector<1x1x8x128xf32>,
    %c0_46 = arith.constant 0 : index
    %c6 = arith.constant 6 : index
    %c0_47 = arith.constant 0 : index
    %c0_48 = arith.constant 0 : index
    %67 = vector.load %arg6[%c0_46, %c6, %c0_47, %c0_48] : memref<1x8x8x128xf32, #tpu.memory_space<vmem>>, vector<1x1x8x128xf32>
    %68 = vector.shape_cast %67 : vector<1x1x8x128xf32> to vector<8x128xf32>
    %69 = arith.addf %68, %32 : vector<8x128xf32>
    %c0_49 = arith.constant 0 : index
    %c6_50 = arith.constant 6 : index
    %c0_51 = arith.constant 0 : index
    %c0_52 = arith.constant 0 : index
    %70 = vector.load %arg6[%c0_49, %c6_50, %c0_51, %c0_52] : memref<1x8x8x128xf32, #tpu.memory_space<vmem>>, vector<1x1x8x128xf32>
    %71 = vector.shape_cast %70 : vector<1x1x8x128xf32> to vector<8x128xf32>
    %72 = vector.shape_cast %69 : vector<8x128xf32> to vector<1x1x8x128xf32>
    tpu.vector_store %arg6[%c0_49, %c6_50, %c0_51, %c0_52], %72 {strides = array<i32>} : memref<1x8x8x128xf32, #tpu.memory_space<vmem>>, vector<1x1x8x128xf32>,
    %c0_53 = arith.constant 0 : index
    %c3 = arith.constant 3 : index
    %c0_54 = arith.constant 0 : index
    %c0_55 = arith.constant 0 : index
    %73 = vector.load %arg6[%c0_53, %c3, %c0_54, %c0_55] : memref<1x8x8x128xf32, #tpu.memory_space<vmem>>, vector<1x1x8x128xf32>
    %74 = vector.shape_cast %73 : vector<1x1x8x128xf32> to vector<8x128xf32>
    %75 = arith.addf %74, %35 : vector<8x128xf32>
    %c0_56 = arith.constant 0 : index
    %c3_57 = arith.constant 3 : index
    %c0_58 = arith.constant 0 : index
    %c0_59 = arith.constant 0 : index
    %76 = vector.load %arg6[%c0_56, %c3_57, %c0_58, %c0_59] : memref<1x8x8x128xf32, #tpu.memory_space<vmem>>, vector<1x1x8x128xf32>
    %77 = vector.shape_cast %76 : vector<1x1x8x128xf32> to vector<8x128xf32>
    %78 = vector.shape_cast %75 : vector<8x128xf32> to vector<1x1x8x128xf32>
    tpu.vector_store %arg6[%c0_56, %c3_57, %c0_58, %c0_59], %78 {strides = array<i32>} : memref<1x8x8x128xf32, #tpu.memory_space<vmem>>, vector<1x1x8x128xf32>,
    %c0_60 = arith.constant 0 : index
    %c7 = arith.constant 7 : index
    %c0_61 = arith.constant 0 : index
    %c0_62 = arith.constant 0 : index
    %79 = vector.load %arg6[%c0_60, %c7, %c0_61, %c0_62] : memref<1x8x8x128xf32, #tpu.memory_space<vmem>>, vector<1x1x8x128xf32>
    %80 = vector.shape_cast %79 : vector<1x1x8x128xf32> to vector<8x128xf32>
    %81 = arith.addf %80, %36 : vector<8x128xf32>
    %c0_63 = arith.constant 0 : index
    %c7_64 = arith.constant 7 : index
    %c0_65 = arith.constant 0 : index
    %c0_66 = arith.constant 0 : index
    %82 = vector.load %arg6[%c0_63, %c7_64, %c0_65, %c0_66] : memref<1x8x8x128xf32, #tpu.memory_space<vmem>>, vector<1x1x8x128xf32>
    %83 = vector.shape_cast %82 : vector<1x1x8x128xf32> to vector<8x128xf32>
    %84 = vector.shape_cast %81 : vector<8x128xf32> to vector<1x1x8x128xf32>
    tpu.vector_store %arg6[%c0_63, %c7_64, %c0_65, %c0_66], %84 {strides = array<i32>} : memref<1x8x8x128xf32, #tpu.memory_space<vmem>>, vector<1x1x8x128xf32>,
    return
  }
  func.func @transform_0(%arg0: i32, %arg1: i32, %arg2: i32) -> (i32, i32) {
    %c0_i32 = arith.constant 0 : i32
    %c0_i32_0 = arith.constant 0 : i32
    %c0_i32_1 = arith.constant 0 : i32
    return %c0_i32, %c0_i32_0 : i32, i32
  }
  func.func @transform_1(%arg0: i32, %arg1: i32, %arg2: i32) -> (i32, i32, i32) {
    %c1_i32 = arith.constant 1 : i32
    %0 = arith.muli %arg0, %c1_i32 : i32
    %1 = arith.addi %0, %arg2 : i32
    %c0_i32 = arith.constant 0 : i32
    %c0_i32_0 = arith.constant 0 : i32
    return %arg1, %1, %c0_i32 : i32, i32, i32
  }
  func.func @transform_2(%arg0: i32, %arg1: i32, %arg2: i32) -> (i32, i32, i32) {
    %c1_i32 = arith.constant 1 : i32
    %0 = arith.muli %arg0, %c1_i32 : i32
    %1 = arith.addi %0, %arg2 : i32
    %c0_i32 = arith.constant 0 : i32
    %c0_i32_0 = arith.constant 0 : i32
    return %arg1, %1, %c0_i32 : i32, i32, i32
  }
  func.func @transform_3(%arg0: i32, %arg1: i32, %arg2: i32) -> (i32, i32, i32, i32) {
    %c2_i32 = arith.constant 2 : i32
    %0 = arith.muli %arg0, %c2_i32 : i32
    %1 = arith.addi %0, %arg1 : i32
    %c0_i32 = arith.constant 0 : i32
    %c0_i32_0 = arith.constant 0 : i32
    %c0_i32_1 = arith.constant 0 : i32
    %c0_i32_2 = arith.constant 0 : i32
    return %1, %c0_i32, %c0_i32_0, %c0_i32_1 : i32, i32, i32, i32
  }
}

</mosaic_0001>

<llo_original>
// kernel: cmd_agnostic_loss.1
$region0: #{cmd_agnostic_loss.1}
  #allocation0 [shape = 'u32[]', space=smem, size = 0x4, offset = 0x4, fixed_abs, tag = 'smem constant byte address 0x4 - core index']
  #allocation1 [shape = 'u32[144,128]{1,0:T(1,128)}', space=vmem, size = 0x12000, scoped, tag = 'internal scratch']
  %s0 = inlined_call_operand.vmem [shape: f32[2,2], index: 0, kind: input, shape index: {}]
  %s1 = inlined_call_operand.vmem [shape: f32[2,8,128], index: 1, kind: input, shape index: {}]
  %s2 = inlined_call_operand.vmem [shape: f32[2,8,128], index: 2, kind: input, shape index: {}]
  %s3 = inlined_call_operand.vmem [shape: f32[2,8,8,128], index: 3, kind: output, shape index: {}]
  %s4 = sld [smem:[#allocation0]]
  $region53: #{cmd_agnostic_loss.1} parent=0
    _
  %s6 = ssub.s32 1, %s4
  %s7 = scalar_select 0, %s6, %s4
  $region1: #{cmd_agnostic_loss.1} parent=0
    #allocation2 [shape = 'u8[1024]{0}', space=smem, size = 0x400, scoped, tag = 'input window, operand 0, single buffered']
    #allocation3 [shape = 's32[2]{0}', space=sflag, size = 0x8, scoped, tag = 'scoped memory for cmd_agnostic_loss.1']
    %8 = vsyncpa [#allocation3], 0
    loop: start=0, step=1, limit=4
    $region2: #{cmd_agnostic_loss.1} parent=1 // loop_pre_header
      _
    $region3: #{cmd_agnostic_loss.1} parent=1 // loop_header
      %s10 = sphi 0, %s14
      %p11 = scmp.ge.s32.totalorder %s10, 4
      %s17 = sphi 0, %s36
      %s18 = sphi 0, %s32
      %s19 = sphi 0, %s28
      %s20 = sphi 0, %s17
      %s21 = sphi 0, %s18
      %s22 = sphi 0, %s19
      %s23 = sphi 0, %s20
      %s24 = sphi 0, %s21
      %s25 = sphi 0, %s22
      %s37 = sphi 0, %s37
      %s39 = sphi 0, %s37
      %s40 = sphi 0, %s39
      %s54 = sphi 0, %s40
      %s64 = sphi 0, %s66
      %s67 = sphi 0, %s64
      %s68 = sphi 0, %s67
      %s84 = sphi 0, %s68
      %s94 = sphi 0, %s96
      %s97 = sphi 0, %s94
      %s98 = sphi 0, %s97
      %s114 = sphi 0, %s98
      %s124 = sphi 0, %s126
      %s127 = sphi 0, %s124
      %s128 = sphi 0, %s127
      %s144 = sphi 0, %s128
    $region4: #{cmd_agnostic_loss.1} parent=1 // loop_header_branch
      %13 = sbr.rel (%p11) target = $region8
    $region5: #{cmd_agnostic_loss.1} parent=1 // loop_body
      %s15 = ssub.s32 %s10, 1
      %s16 = ssub.s32 %s10, 2
      %s26 = sadd.s32 1, %s19
      %p27 = scmp.ge.s32.totalorder %s26, 1
      %s28 = scalar_select %p27, 0, %s26
      %s29 = sadd.s32 1, %s18
      %s30 = scalar_select %p27, %s29, %s18
      %p31 = scmp.ge.s32.totalorder %s30, 2
      %s32 = scalar_select %p31, 0, %s30
      %s33 = sadd.s32 1, %s17
      %s34 = scalar_select %p31, %s33, %s17
      %p35 = scmp.ge.s32.totalorder %s34, 1
      %s36 = scalar_select %p35, 0, %s34
      %s38 = sadd.s32 %s37, 1
      %p41 = scmp.eq.s32.totalorder %s10, 1
      %p42 = scmp.ne.s32.totalorder %s37, %s39
      %p43 = scmp.eq.s32.totalorder %s10, 0
      %p44 = por %p42, %p43
      %p45 = scmp.ne.s32.totalorder %s37, %s39
      %p46 = scmp.eq.s32.totalorder %s15, 1
      %p47 = por %p45, %p46
      %p48 = scmp.ne.s32.totalorder %s39, %s40
      %p49 = scmp.eq.s32.totalorder %s15, 0
      %p50 = por %p48, %p49
      %p51 = scmp.ne.s32.totalorder %s39, %s40
      %p52 = scmp.eq.s32.totalorder %s16, 1
      %p53 = por %p51, %p52
      %p55 = scmp.ne.s32.totalorder %s40, %s54
      %p56 = scmp.eq.s32.totalorder %s16, 0
      %p57 = por %p55, %p56
      %s58 = sadd.s32 %s17, %s19
      %s59 = sadd.s32 %s36, %s28
      %s60 = ssub.s32 %s18, %s32
      %s61 = ssub.s32 %s58, %s59
      %s62 = sor.u32 %s60, %s61
      %p63 = scmp.eq.s32.totalorder %s62, 0
      %s65 = sadd.s32 %s64, 1
      %s66 = scalar_select %p63, %s64, %s65
      %p69 = pneg %p63
      %p70 = scmp.eq.s32.totalorder %s10, 1
      %p71 = por %p69, %p70
      %p72 = scmp.ne.s32.totalorder %s64, %s67
      %p73 = scmp.eq.s32.totalorder %s10, 0
      %p74 = por %p72, %p73
      %p75 = scmp.ne.s32.totalorder %s64, %s67
      %p76 = scmp.eq.s32.totalorder %s15, 1
      %p77 = por %p75, %p76
      %p78 = scmp.ne.s32.totalorder %s67, %s68
      %p79 = scmp.eq.s32.totalorder %s15, 0
      %p80 = por %p78, %p79
      %p81 = scmp.ne.s32.totalorder %s67, %s68
      %p82 = scmp.eq.s32.totalorder %s16, 1
      %p83 = por %p81, %p82
      %p85 = scmp.ne.s32.totalorder %s68, %s84
      %p86 = scmp.eq.s32.totalorder %s16, 0
      %p87 = por %p85, %p86
      %s88 = sadd.s32 %s17, %s19
      %s89 = sadd.s32 %s36, %s28
      %s90 = ssub.s32 %s18, %s32
      %s91 = ssub.s32 %s88, %s89
      %s92 = sor.u32 %s90, %s91
      %p93 = scmp.eq.s32.totalorder %s92, 0
      %s95 = sadd.s32 %s94, 1
      %s96 = scalar_select %p93, %s94, %s95
      %p99 = pneg %p93
      %p100 = scmp.eq.s32.totalorder %s10, 1
      %p101 = por %p99, %p100
      %p102 = scmp.ne.s32.totalorder %s94, %s97
      %p103 = scmp.eq.s32.totalorder %s10, 0
      %p104 = por %p102, %p103
      %p105 = scmp.ne.s32.totalorder %s94, %s97
      %p106 = scmp.eq.s32.totalorder %s15, 1
      %p107 = por %p105, %p106
      %p108 = scmp.ne.s32.totalorder %s97, %s98
      %p109 = scmp.eq.s32.totalorder %s15, 0
      %p110 = por %p108, %p109
      %p111 = scmp.ne.s32.totalorder %s97, %s98
      %p112 = scmp.eq.s32.totalorder %s16, 1
      %p113 = por %p111, %p112
      %p115 = scmp.ne.s32.totalorder %s98, %s114
      %p116 = scmp.eq.s32.totalorder %s16, 0
      %p117 = por %p115, %p116
      %s118 = smul.u32 %s17, 2
      %s119 = sadd.s32 %s118, %s18
      %s120 = smul.u32 %s36, 2
      %s121 = sadd.s32 %s120, %s32
      %s122 = ssub.s32 %s119, %s121
      %p123 = scmp.eq.s32.totalorder %s122, 0
      %s125 = sadd.s32 %s124, 1
      %s126 = scalar_select %p123, %s124, %s125
      %p129 = pneg %p123
      %p130 = scmp.eq.s32.totalorder %s10, 1
      %p131 = por %p129, %p130
      %p132 = scmp.ne.s32.totalorder %s124, %s127
      %p133 = scmp.eq.s32.totalorder %s10, 0
      %p134 = por %p132, %p133
      %p135 = scmp.ne.s32.totalorder %s124, %s127
      %p136 = scmp.eq.s32.totalorder %s15, 1
      %p137 = por %p135, %p136
      %p138 = scmp.ne.s32.totalorder %s127, %s128
      %p139 = scmp.eq.s32.totalorder %s15, 0
      %p140 = por %p138, %p139
      %p141 = scmp.ne.s32.totalorder %s127, %s128
      %p142 = scmp.eq.s32.totalorder %s16, 1
      %p143 = por %p141, %p142
      %p145 = scmp.ne.s32.totalorder %s128, %s144
      %p146 = scmp.eq.s32.totalorder %s16, 0
      %p147 = por %p145, %p146
      %p148 = scmp.le.s32.totalorder 1, %s10
      %p149 = scmp.lt.s32.totalorder %s10, 3
      %p150 = pnand %p148, %p149
      %p151 = pneg %p150
      // Predicated region
      $region9: #{cmd_agnostic_loss.1} parent=5 // pred_check
        _
      $region10: #{cmd_agnostic_loss.1} parent=5 // pred_check_branch
        %153 = sbr.rel (%p150) target = $region12
      $region11: #{cmd_agnostic_loss.1} parent=5 // pred_region
        %s154 = ssub.s32 %s10, 1
        // Predicated region
        $region13: #{cmd_agnostic_loss.1} parent=11 // pred_check
          %p155 = pneg %p50
        $region14: #{cmd_agnostic_loss.1} parent=11 // pred_check_branch
          %157 = sbr.rel (%p155) target = $region16
        $region15: #{cmd_agnostic_loss.1} parent=11 // pred_region
          %s159 = ssub.s32 32, 32
          %160 = vsyncadd [#allocation3], %s159
          %s162 = sshll.u32 %s0, 4
          %s163 = int_to_ptr.vmem [resolvable:$true] %s162
          %165 = dma.vmem_to_smem %s163, 32, [#allocation2], [#allocation3]
        $region16: #{cmd_agnostic_loss.1} parent=11 // pred_fallthru
          _
      $region12: #{cmd_agnostic_loss.1} parent=5 // pred_fallthru
        _
      %p166 = scmp.lt.s32.totalorder %s10, 2
      // Predicated region
      $region17: #{cmd_agnostic_loss.1} parent=5 // pred_check
        %p167 = pneg %p166
      $region18: #{cmd_agnostic_loss.1} parent=5 // pred_check_branch
        %169 = sbr.rel (%p167) target = $region20
      $region19: #{cmd_agnostic_loss.1} parent=5 // pred_region
        // Predicated region
        $region21: #{cmd_agnostic_loss.1} parent=19 // pred_check
          %p170 = pneg %p74
        $region22: #{cmd_agnostic_loss.1} parent=19 // pred_check_branch
          %172 = sbr.rel (%p170) target = $region24
        $region23: #{cmd_agnostic_loss.1} parent=19 // pred_region
          %s173 = sadd.s32 %s17, %s19
          %p174 = scmp.lt.s32.totalorder %s18, 1
          %s175 = scalar_select %p174, %s18, 1
          %p176 = scmp.lt.s32.totalorder %s173, 0
          %s177 = scalar_select %p176, %s173, 0
          %s178 = sadd.s32 %s177, %s175
          %s179 = smul.addr %s178, 8
          %s180 = scalar_lea.vmem %s1, %s179
          %s181 = sadd.s32 %s17, %s19
        $region24: #{cmd_agnostic_loss.1} parent=19 // pred_fallthru
          _
        // Predicated region
        $region25: #{cmd_agnostic_loss.1} parent=19 // pred_check
          %p182 = pneg %p104
        $region26: #{cmd_agnostic_loss.1} parent=19 // pred_check_branch
          %184 = sbr.rel (%p182) target = $region28
        $region27: #{cmd_agnostic_loss.1} parent=19 // pred_region
          %s185 = sadd.s32 %s17, %s19
          %p186 = scmp.lt.s32.totalorder %s18, 1
          %s187 = scalar_select %p186, %s18, 1
          %p188 = scmp.lt.s32.totalorder %s185, 0
          %s189 = scalar_select %p188, %s185, 0
          %s190 = sadd.s32 %s189, %s187
          %s191 = smul.addr %s190, 8
          %s192 = scalar_lea.vmem %s2, %s191
          %s193 = sadd.s32 %s17, %s19
        $region28: #{cmd_agnostic_loss.1} parent=19 // pred_fallthru
          _
      $region20: #{cmd_agnostic_loss.1} parent=5 // pred_fallthru
        _
      %p194 = scmp.le.s32.totalorder 1, %s10
      %p195 = scmp.lt.s32.totalorder %s10, 3
      %p196 = pnand %p194, %p195
      %p197 = pneg %p196
      // Predicated region
      $region29: #{cmd_agnostic_loss.1} parent=5 // pred_check
        _
      $region30: #{cmd_agnostic_loss.1} parent=5 // pred_check_branch
        %199 = sbr.rel (%p196) target = $region32
      $region31: #{cmd_agnostic_loss.1} parent=5 // pred_region
        %s200 = ssub.s32 %s10, 1
        // Predicated region
        $region33: #{cmd_agnostic_loss.1} parent=31 // pred_check
          %p201 = pneg %p50
        $region34: #{cmd_agnostic_loss.1} parent=31 // pred_check_branch
          %203 = sbr.rel (%p201) target = $region36
        $region35: #{cmd_agnostic_loss.1} parent=31 // pred_region
          %204 = dma.done [#allocation3], 32
        $region36: #{cmd_agnostic_loss.1} parent=31 // pred_fallthru
          _
        %205 = sfence
        %p206 = pneg %p50
        %p207 = pneg %p47
        %s208 = sadd.s32 %s20, %s22
        %p209 = scmp.lt.s32.totalorder %s21, 1
        %s210 = scalar_select %p209, %s21, 1
        %p211 = scmp.lt.s32.totalorder %s208, 0
        %s212 = scalar_select %p211, %s208, 0
        %s213 = sadd.s32 %s212, %s210
        %s214 = smul.addr %s213, 8
        %s215 = scalar_lea.vmem %s1, %s214
        %p216 = pneg %p80
        %p217 = pneg %p77
        %s218 = sadd.s32 %s20, %s22
        %p219 = scmp.lt.s32.totalorder %s21, 1
        %s220 = scalar_select %p219, %s21, 1
        %p221 = scmp.lt.s32.totalorder %s218, 0
        %s222 = scalar_select %p221, %s218, 0
        %s223 = sadd.s32 %s222, %s220
        %s224 = smul.addr %s223, 8
        %s225 = scalar_lea.vmem %s2, %s224
        %p226 = pneg %p110
        %p227 = pneg %p107
        %p228 = pneg %p140
        %p229 = pneg %p137
        %s230 = smul.u32 %s20, 2
        %s231 = sadd.s32 %s230, %s21
        %p232 = scmp.lt.s32.totalorder %s231, 1
        %s233 = scalar_select %p232, %s231, 1
        %s234 = smul.addr %s233, 8
        %s235 = smul.addr %s234, 8
        %s236 = scalar_lea.vmem %s3, %s235
        %s237 = sadd.s32 %s20, %s22
        %p238 = scmp.lt.s32.totalorder %s21, 1
        %s239 = scalar_select %p238, %s21, 1
        %p240 = scmp.lt.s32.totalorder %s237, 0
        %s241 = scalar_select %p240, %s237, 0
        %s242 = sadd.s32 %s241, %s239
        %s243 = smul.addr %s242, 8
        %s244 = scalar_lea.vmem %s1, %s243
        %s245 = sadd.s32 %s20, %s22
        %s246 = sadd.s32 %s20, %s22
        %p247 = scmp.lt.s32.totalorder %s21, 1
        %s248 = scalar_select %p247, %s21, 1
        %p249 = scmp.lt.s32.totalorder %s246, 0
        %s250 = scalar_select %p249, %s246, 0
        %s251 = sadd.s32 %s250, %s248
        %s252 = smul.addr %s251, 8
        %s253 = scalar_lea.vmem %s2, %s252
        %s254 = sadd.s32 %s20, %s22
        %s255 = smul.u32 %s20, 2
        %s256 = sadd.s32 %s255, %s21
        %p257 = scmp.lt.s32.totalorder %s256, 1
        %s258 = scalar_select %p257, %s256, 1
        %s259 = smul.addr %s258, 8
        %s260 = smul.addr %s259, 8
        %s261 = scalar_lea.vmem %s3, %s260
        %s262 = smul.u32 %s20, 2
        %s263 = sadd.s32 %s262, %s21
        %p264 = scmp.eq.s32.totalorder %s22, 0
        // Predicated region
        $region37: #{cmd_agnostic_loss.1} parent=31 // pred_check
          %p265 = pneg %p264
        $region38: #{cmd_agnostic_loss.1} parent=31 // pred_check_branch
          %267 = sbr.rel (%p265) target = $region40
        $region39: #{cmd_agnostic_loss.1} parent=31 // pred_region
          %268 = vst [vmem:[%s261] sm:$0xff] 0.0
          %269 = vst [vmem:[%s261 + $0x8] sm:$0xff] 0.0
          %270 = vst [vmem:[%s261 + $0x10] sm:$0xff] 0.0
          %271 = vst [vmem:[%s261 + $0x18] sm:$0xff] 0.0
          %272 = vst [vmem:[%s261 + $0x20] sm:$0xff] 0.0
          %273 = vst [vmem:[%s261 + $0x28] sm:$0xff] 0.0
          %274 = vst [vmem:[%s261 + $0x30] sm:$0xff] 0.0
          %275 = vst [vmem:[%s261 + $0x38] sm:$0xff] 0.0
        $region40: #{cmd_agnostic_loss.1} parent=31 // pred_fallthru
          _
        %s276 = sld [smem:[#allocation2 + %s21]]
        %v277 = vstv %s276
        %s278 = sshra.s32 %s21, 7
        %s279 = sand.u32 %s21, 127
        %s280 = sadd.s32 %s278, 1
        %s281 = smul.u32 %s280, 128
        %s282 = sshra.s32 %s21, 7
        %s283 = sand.u32 %s21, 127
        %s284 = sadd.s32 %s281, %s283
        %s285 = sld [smem:[#allocation2 + %s284]]
        %v286 = vstv %s285
        %v287 = vld [vmem:[%s244] sm:$0xff]
        %v288 = vsub.f32 %v287, %v277
        %v289 = vld [vmem:[%s253] sm:$0xff]
        %v290 = vsub.f32 %v289, %v286
        %v291 = vadd.f32 %v288, 0.0
        %v292 = vadd.f32 %v290, 0.0
        %v293 = vmul.f32 %v288, %v288
        %v294 = vmul.f32 %v290, %v290
        %v295 = vadd.f32 %v293, 0.0
        %v296 = vadd.f32 %v294, 0.0
        %v297 = vmul.f32 %v293, %v288
        %v298 = vmul.f32 %v294, %v290
        %v299 = vadd.f32 %v297, 0.0
        %v300 = vadd.f32 %v298, 0.0
        %v301 = vmul.f32 %v297, %v288
        %v302 = vmul.f32 %v298, %v290
        %v303 = vadd.f32 %v301, 0.0
        %v304 = vadd.f32 %v302, 0.0
        %v305 = vld [vmem:[%s261] sm:$0xff]
        %v306 = vadd.f32 %v305, %v291
        %307 = vst [vmem:[%s261] sm:$0xff] %v306
        %s308 = scalar_lea.vmem %s261, 32
        %v309 = vld [vmem:[%s308] sm:$0xff]
        %v310 = vadd.f32 %v309, %v292
        %311 = vst [vmem:[%s308] sm:$0xff] %v310
        %s312 = scalar_lea.vmem %s261, 8
        %v313 = vld [vmem:[%s312] sm:$0xff]
        %v314 = vadd.f32 %v313, %v295
        %315 = vst [vmem:[%s312] sm:$0xff] %v314
        %s316 = scalar_lea.vmem %s261, 40
        %v317 = vld [vmem:[%s316] sm:$0xff]
        %v318 = vadd.f32 %v317, %v296
        %319 = vst [vmem:[%s316] sm:$0xff] %v318
        %s320 = scalar_lea.vmem %s261, 16
        %v321 = vld [vmem:[%s320] sm:$0xff]
        %v322 = vadd.f32 %v321, %v299
        %323 = vst [vmem:[%s320] sm:$0xff] %v322
        %s324 = scalar_lea.vmem %s261, 48
        %v325 = vld [vmem:[%s324] sm:$0xff]
        %v326 = vadd.f32 %v325, %v300
        %327 = vst [vmem:[%s324] sm:$0xff] %v326
        %s328 = scalar_lea.vmem %s261, 24
        %v329 = vld [vmem:[%s328] sm:$0xff]
        %v330 = vadd.f32 %v329, %v303
        %331 = vst [vmem:[%s328] sm:$0xff] %v330
        %s332 = scalar_lea.vmem %s261, 56
        %v333 = vld [vmem:[%s332] sm:$0xff]
        %v334 = vadd.f32 %v333, %v304
        %335 = vst [vmem:[%s332] sm:$0xff] %v334
        %s336 = smul.u32 %s20, 2
        %s337 = sadd.s32 %s336, %s21
        %p338 = scmp.lt.s32.totalorder %s337, 1
        %s339 = scalar_select %p338, %s337, 1
        %s340 = smul.addr %s339, 8
        %s341 = smul.addr %s340, 8
        %s342 = scalar_lea.vmem %s3, %s341
        // Predicated region
        $region41: #{cmd_agnostic_loss.1} parent=31 // pred_check
          %p343 = pneg %p137
        $region42: #{cmd_agnostic_loss.1} parent=31 // pred_check_branch
          %345 = sbr.rel (%p343) target = $region44
        $region43: #{cmd_agnostic_loss.1} parent=31 // pred_region
          %s346 = smul.u32 %s20, 2
          %s347 = sadd.s32 %s346, %s21
        $region44: #{cmd_agnostic_loss.1} parent=31 // pred_fallthru
          _
      $region32: #{cmd_agnostic_loss.1} parent=5 // pred_fallthru
        _
      %p348 = scmp.le.s32.totalorder 2, %s10
      // Predicated region
      $region45: #{cmd_agnostic_loss.1} parent=5 // pred_check
        %p349 = pneg %p348
      $region46: #{cmd_agnostic_loss.1} parent=5 // pred_check_branch
        %351 = sbr.rel (%p349) target = $region48
      $region47: #{cmd_agnostic_loss.1} parent=5 // pred_region
        %s352 = ssub.s32 %s10, 2
        // Predicated region
        $region49: #{cmd_agnostic_loss.1} parent=47 // pred_check
          %p353 = pneg %p143
        $region50: #{cmd_agnostic_loss.1} parent=47 // pred_check_branch
          %355 = sbr.rel (%p353) target = $region52
        $region51: #{cmd_agnostic_loss.1} parent=47 // pred_region
          %s356 = smul.u32 %s23, 2
          %s357 = sadd.s32 %s356, %s24
          %p358 = scmp.lt.s32.totalorder %s357, 1
          %s359 = scalar_select %p358, %s357, 1
          %s360 = smul.addr %s359, 8
          %s361 = smul.addr %s360, 8
          %s362 = scalar_lea.vmem %s3, %s361
        $region52: #{cmd_agnostic_loss.1} parent=47 // pred_fallthru
          _
      $region48: #{cmd_agnostic_loss.1} parent=5 // pred_fallthru
        _
    $region6: #{cmd_agnostic_loss.1} parent=1 // loop_footer
      %s14 = sadd.s32 1, %s10
    $region7: #{cmd_agnostic_loss.1} parent=1 // loop_footer_branch
      %9 = sbr.rel target = $region3
    $region8: #{cmd_agnostic_loss.1} parent=1 // loop_exit
      _
    %363 = vsyncpa [#allocation3], 1
    %s364 = scalar_lea.sflag [#allocation3], 1
    %365 = vsyncpa %s364, 1

</llo_original>
